<compile_context>
chip_gen: v6e
topology: v6e:2x2x1
jax: 0.10.0
libtpu: 0.0.40
codegen_flags: <defaults>
</compile_context>

<pallas_src>
import math

import jax
import jax.numpy as jnp
from jax.experimental import pallas as pl
from jax.experimental.pallas import tpu as pltpu


def _make_cheb_kernel(K, N, FT_in, FT_out):
    def kernel(x_ref, chebt_ref, theta_ref, o_ref):
        # x_ref:     (1, N, FT_in)       one batch element, (F_in, T) fused on lanes
        # chebt_ref: (K*N, N)            vstack_k(T_k^T), pre-transposed in the wrapper
        # theta_ref: (K, FT_in, FT_out)  kron(Theta_k, I_T)
        # o_ref:     (1, N, FT_out)
        xf = x_ref[0]                                            # (N, FT_in)

        # Fused graph contraction for all K polynomials at once:
        #   r[k*N + n, f*T + t] = sum_m T_k[m, n] * x[m, f, t]
        r = jnp.dot(chebt_ref[...], xf,
                    preferred_element_type=jnp.float32)          # (K*N, FT_in)
        r3 = r.reshape(K, N, FT_in)

        # Feature mixing: one lane-dense 2-D GEMM per k (K small & static).
        acc = jnp.dot(r3[0], theta_ref[0],
                      preferred_element_type=jnp.float32)        # (N, FT_out)
        for k in range(1, K):
            acc = acc + jnp.dot(r3[k], theta_ref[k],
                                preferred_element_type=jnp.float32)

        o_ref[0] = jnp.maximum(acc, 0.0).astype(o_ref.dtype)

    return kernel


def cheb_conv_pallas(x, cheb_polys, theta, *, use_bf16_operands=False):
    """
    x:          (B, N, F_in, T)   float32
    cheb_polys: (K, N, N)         float32
    theta:      (K, F_in, F_out)  float32
    returns:    (B, N, F_out, T)  same dtype as x
    """
    B, N, F_in, T = x.shape
    K, _, F_out = theta.shape
    FT_in, FT_out = F_in * T, F_out * T
    out_dtype = x.dtype

    # --- wrapper-side, parameter-only preprocessing (done once, tiny) -------
    # vstack of T_k^T -> the in-kernel graph GEMM needs no transposes at all.
    cheb_t = jnp.transpose(cheb_polys, (0, 2, 1)).reshape(K * N, N)
    # Lift Theta_k to act on the fused (F, T) lane dimension: kron(Theta_k, I_T).
    eye_t = jnp.eye(T, dtype=theta.dtype)
    theta_kron = jnp.stack([jnp.kron(theta[k], eye_t) for k in range(K)], axis=0)

    # Free trailing-dim reshape (no transpose, no HBM round trip): the PyTorch
    # layout (B, N, F_in, T) viewed as (B, N, F_in*T).
    x_flat = x.reshape(B, N, FT_in)

    if use_bf16_operands:
        # v6e / v7x MXU fast path: bf16 operands, f32 accumulation in-kernel.
        x_flat = x_flat.astype(jnp.bfloat16)
        cheb_t = cheb_t.astype(jnp.bfloat16)
        theta_kron = theta_kron.astype(jnp.bfloat16)

    # --- explicit VMEM budget (v5e default scoped VMEM is only 16 MiB) ------
    def _nbytes(shape, dtype):
        return math.prod(shape) * jnp.dtype(dtype).itemsize

    blk_bytes = (
        2 * _nbytes((1, N, FT_in), x_flat.dtype)          # double-buffered input
        + 2 * _nbytes((1, N, FT_out), out_dtype)          # double-buffered output
        + 2 * _nbytes((K * N, N), cheb_t.dtype)           # resident constants
        + 2 * _nbytes((K, FT_in, FT_out), theta_kron.dtype)
    )
    vmem_limit = int(min(max(blk_bytes + (4 << 20), 16 << 20), 64 << 20))

    out_flat = pl.pallas_call(
        _make_cheb_kernel(K, N, FT_in, FT_out),
        out_shape=jax.ShapeDtypeStruct((B, N, FT_out), out_dtype),
        grid_spec=pltpu.PrefetchScalarGridSpec(
            num_scalar_prefetch=0,
            grid=(B,),
            in_specs=[
                pl.BlockSpec((1, N, FT_in), lambda b: (b, 0, 0)),
                # Constant operands: same block every grid step, so the
                # pipeline does not re-fetch them between consecutive steps.
                pl.BlockSpec((K * N, N), lambda b: (0, 0)),
                pl.BlockSpec((K, FT_in, FT_out), lambda b: (0, 0, 0)),
            ],
            out_specs=pl.BlockSpec((1, N, FT_out), lambda b: (b, 0, 0)),
        ),
        compiler_params=pltpu.CompilerParams(
            # "parallel" lets v7x shard the B axis across its 2 TensorCores.
            dimension_semantics=("parallel",),
            vmem_limit_bytes=vmem_limit,
        ),
    )(x_flat, cheb_t, theta_kron)

    # Free trailing-dim reshape back to the PyTorch convention.
    return out_flat.reshape(B, N, F_out, T)


def cheb_conv_reference(x, cheb_polys, theta):
    """Pure-JAX reference of the PyTorch forward."""
    # out[b,n,o,t] = relu( sum_k sum_m sum_f T_k[m,n] x[b,m,f,t] Theta_k[f,o] )
    out = jnp.einsum("kmn,bmft,kfo->bnot", cheb_polys, x, theta)
    return jnp.maximum(out, 0.0)


def make_cheb_polynomials(key, K, N):
    """Deterministically build K Chebyshev polynomials from a random scaled Laplacian."""
    a = jax.random.uniform(key, (N, N), dtype=jnp.float32)
    adj = (a + a.T) * 0.5
    adj = adj * (1.0 - jnp.eye(N, dtype=jnp.float32))
    deg = jnp.sum(adj, axis=1)
    d_inv_sqrt = 1.0 / jnp.sqrt(deg + 1e-6)
    lap = jnp.eye(N, dtype=jnp.float32) - (d_inv_sqrt[:, None] * adj * d_inv_sqrt[None, :])
    l_tilde = lap - jnp.eye(N, dtype=jnp.float32)   # scaled roughly into [-1, 1]
    polys = [jnp.eye(N, dtype=jnp.float32), l_tilde]
    for _ in range(2, K):
        polys.append(2.0 * l_tilde @ polys[-1] - polys[-2])
    return jnp.stack(polys[:K], axis=0)  # (K, N, N)


if __name__ == "__main__":
    # Small shapes consistent with the module's forward.
    B, N, F_in, F_out, T, K = 2, 16, 4, 8, 8, 3

    root = jax.random.PRNGKey(0)
    k_x, k_adj, k_theta = jax.random.split(root, 3)

    x = jax.random.normal(k_x, (B, N, F_in, T), dtype=jnp.float32)
    cheb_polys = make_cheb_polynomials(k_adj, K, N)                       # (K, N, N)
    theta = jax.random.normal(k_theta, (K, F_in, F_out), dtype=jnp.float32) * 0.1

    out = cheb_conv_pallas(x, cheb_polys, theta)
    out = jax.block_until_ready(out)

    ref = cheb_conv_reference(x, cheb_polys, theta)
    assert out.shape == (B, N, F_out, T)
    assert jnp.allclose(out, ref, atol=1e-4, rtol=1e-4), "mismatch vs reference"

    print("KERNEL_OK")
</pallas_src>

<mosaic_0001>
module attributes {stable_mosaic.version = 11 : i64} {
  func.func @kernel(%arg0: i32, %arg1: memref<1x16x32xf32, #tpu.memory_space<vmem>>, %arg2: memref<48x16xf32, #tpu.memory_space<vmem>>, %arg3: memref<3x32x64xf32, #tpu.memory_space<vmem>>, %arg4: memref<1x16x64xf32, #tpu.memory_space<vmem>>) attributes {dimension_semantics = [#tpu.dimension_semantics<parallel>], iteration_bounds = array<i64: 2>, scalar_prefetch = 0 : i64, scratch_operands = 0 : i64, tpu.core_type = #tpu.core_type<tc>, window_params = [{transform_indices = @transform_0, window_bounds = array<i64: 1, 16, 32>}, {pipeline_mode = #tpu.pipeline_mode<synchronous>, transform_indices = @transform_1, window_bounds = array<i64: 48, 16>}, {pipeline_mode = #tpu.pipeline_mode<synchronous>, transform_indices = @transform_2, window_bounds = array<i64: 3, 32, 64>}, {transform_indices = @transform_3, window_bounds = array<i64: 1, 16, 64>}]} {
    %c0 = arith.constant 0 : index
    %c0_0 = arith.constant 0 : index
    %c0_1 = arith.constant 0 : index
    %0 = vector.load %arg1[%c0, %c0_0, %c0_1] : memref<1x16x32xf32, #tpu.memory_space<vmem>>, vector<1x16x32xf32>
    %1 = vector.shape_cast %0 : vector<1x16x32xf32> to vector<16x32xf32>
    %c0_2 = arith.constant 0 : index
    %c0_3 = arith.constant 0 : index
    %2 = vector.load %arg2[%c0_2, %c0_3] : memref<48x16xf32, #tpu.memory_space<vmem>>, vector<48x16xf32>
    %cst = arith.constant dense<0.000000e+00> : vector<48x32xf32>
    %3 = tpu.matmul %2, %1, %cst {dimension_numbers = #tpu.dot_dimension_numbers<[1], [0], [0], [1], [0, 0, 1, 1], [], []>} : vector<48x16xf32>, vector<16x32xf32>, vector<48x32xf32> -> vector<48x32xf32>
    %4 = vector.shape_cast %3 : vector<48x32xf32> to vector<3x16x32xf32>
    %5 = vector.extract_strided_slice %4 {offsets = [0, 0, 0], sizes = [1, 16, 32], strides = [1, 1, 1]} : vector<3x16x32xf32> to vector<1x16x32xf32>
    %6 = vector.shape_cast %5 : vector<1x16x32xf32> to vector<16x32xf32>
    %c0_4 = arith.constant 0 : index
    %c0_5 = arith.constant 0 : index
    %c0_6 = arith.constant 0 : index
    %7 = vector.load %arg3[%c0_4, %c0_5, %c0_6] : memref<3x32x64xf32, #tpu.memory_space<vmem>>, vector<1x32x64xf32>
    %8 = vector.shape_cast %7 : vector<1x32x64xf32> to vector<32x64xf32>
    %cst_7 = arith.constant dense<0.000000e+00> : vector<16x64xf32>
    %9 = tpu.matmul %6, %8, %cst_7 {dimension_numbers = #tpu.dot_dimension_numbers<[1], [0], [0], [1], [0, 0, 1, 1], [], []>} : vector<16x32xf32>, vector<32x64xf32>, vector<16x64xf32> -> vector<16x64xf32>
    %10 = vector.extract_strided_slice %4 {offsets = [1, 0, 0], sizes = [1, 16, 32], strides = [1, 1, 1]} : vector<3x16x32xf32> to vector<1x16x32xf32>
    %11 = vector.shape_cast %10 : vector<1x16x32xf32> to vector<16x32xf32>
    %c1 = arith.constant 1 : index
    %c0_8 = arith.constant 0 : index
    %c0_9 = arith.constant 0 : index
    %12 = vector.load %arg3[%c1, %c0_8, %c0_9] : memref<3x32x64xf32, #tpu.memory_space<vmem>>, vector<1x32x64xf32>
    %13 = vector.shape_cast %12 : vector<1x32x64xf32> to vector<32x64xf32>
    %cst_10 = arith.constant dense<0.000000e+00> : vector<16x64xf32>
    %14 = tpu.matmul %11, %13, %cst_10 {dimension_numbers = #tpu.dot_dimension_numbers<[1], [0], [0], [1], [0, 0, 1, 1], [], []>} : vector<16x32xf32>, vector<32x64xf32>, vector<16x64xf32> -> vector<16x64xf32>
    %15 = arith.addf %9, %14 : vector<16x64xf32>
    %16 = vector.extract_strided_slice %4 {offsets = [2, 0, 0], sizes = [1, 16, 32], strides = [1, 1, 1]} : vector<3x16x32xf32> to vector<1x16x32xf32>
    %17 = vector.shape_cast %16 : vector<1x16x32xf32> to vector<16x32xf32>
    %c2 = arith.constant 2 : index
    %c0_11 = arith.constant 0 : index
    %c0_12 = arith.constant 0 : index
    %18 = vector.load %arg3[%c2, %c0_11, %c0_12] : memref<3x32x64xf32, #tpu.memory_space<vmem>>, vector<1x32x64xf32>
    %19 = vector.shape_cast %18 : vector<1x32x64xf32> to vector<32x64xf32>
    %cst_13 = arith.constant dense<0.000000e+00> : vector<16x64xf32>
    %20 = tpu.matmul %17, %19, %cst_13 {dimension_numbers = #tpu.dot_dimension_numbers<[1], [0], [0], [1], [0, 0, 1, 1], [], []>} : vector<16x32xf32>, vector<32x64xf32>, vector<16x64xf32> -> vector<16x64xf32>
    %21 = arith.addf %15, %20 : vector<16x64xf32>
    %cst_14 = arith.constant 0.000000e+00 : f32
    %22 = vector.broadcast %cst_14 : f32 to vector<16x64xf32>
    %23 = arith.maximumf %21, %22 : vector<16x64xf32>
    %c0_15 = arith.constant 0 : index
    %c0_16 = arith.constant 0 : index
    %c0_17 = arith.constant 0 : index
    %24 = vector.load %arg4[%c0_15, %c0_16, %c0_17] : memref<1x16x64xf32, #tpu.memory_space<vmem>>, vector<1x16x64xf32>
    %25 = vector.shape_cast %24 : vector<1x16x64xf32> to vector<16x64xf32>
    %26 = vector.shape_cast %23 : vector<16x64xf32> to vector<1x16x64xf32>
    tpu.vector_store %arg4[%c0_15, %c0_16, %c0_17], %26 {strides = array<i32>} : memref<1x16x64xf32, #tpu.memory_space<vmem>>, vector<1x16x64xf32>,
    return
  }
  func.func @transform_0(%arg0: i32) -> (i32, i32, i32) {
    %c0_i32 = arith.constant 0 : i32
    %c0_i32_0 = arith.constant 0 : i32
    %c0_i32_1 = arith.constant 0 : i32
    return %arg0, %c0_i32, %c0_i32_0 : i32, i32, i32
  }
  func.func @transform_1(%arg0: i32) -> (i32, i32) {
    %c0_i32 = arith.constant 0 : i32
    %c0_i32_0 = arith.constant 0 : i32
    %c0_i32_1 = arith.constant 0 : i32
    return %c0_i32, %c0_i32_0 : i32, i32
  }
  func.func @transform_2(%arg0: i32) -> (i32, i32, i32) {
    %c0_i32 = arith.constant 0 : i32
    %c0_i32_0 = arith.constant 0 : i32
    %c0_i32_1 = arith.constant 0 : i32
    %c0_i32_2 = arith.constant 0 : i32
    return %c0_i32, %c0_i32_0, %c0_i32_1 : i32, i32, i32
  }
  func.func @transform_3(%arg0: i32) -> (i32, i32, i32) {
    %c0_i32 = arith.constant 0 : i32
    %c0_i32_0 = arith.constant 0 : i32
    %c0_i32_1 = arith.constant 0 : i32
    return %arg0, %c0_i32, %c0_i32_0 : i32, i32, i32
  }
}

</mosaic_0001>

<llo_original>
// kernel: tpu_custom_call.1
$region0: #{tpu_custom_call.1}
  #allocation0 [shape = 'u32[]', space=smem, size = 0x4, offset = 0x4, fixed_abs, tag = 'smem constant byte address 0x4 - core index']
  #allocation1 [shape = 'u32[144,128]{1,0:T(1,128)}', space=vmem, size = 0x12000, scoped, tag = 'internal scratch']
  %s0 = inlined_call_operand.vmem [shape: f32[2,16,32], index: 0, kind: input, shape index: {}]
  %s1 = inlined_call_operand.vmem [shape: f32[48,16], index: 1, kind: input, shape index: {}]
  %s2 = inlined_call_operand.hbm [shape: f32[3,32,64], index: 2, kind: input, shape index: {}]
  %s3 = inlined_call_operand.hbm [shape: f32[2,16,64], index: 3, kind: output, shape index: {}]
  %s4 = sld [smem:[#allocation0]]
  $region49: #{tpu_custom_call.1} parent=0
    _
  %s6 = ssub.s32 1, %s4
  %s7 = scalar_select 0, %s6, %s4
  $region1: #{tpu_custom_call.1} parent=0
    #allocation2 [shape = 'u8[49152]{0}', space=vmem, size = 0xc000, scoped, tag = 'input window, operand 2, single buffered']
    #allocation3 [shape = 's32[2]{0}', space=sflag, size = 0x8, scoped, tag = 'scoped memory for tpu_custom_call.1']
    #allocation4 [shape = 's32[2]{0}', space=sflag, size = 0x8, scoped, tag = 'scoped memory for tpu_custom_call.1']
    #allocation5 [shape = 'u8[16384]{0}', space=vmem, size = 0x4000, scoped, tag = 'output window, operand 0']
    %8 = vsyncpa [#allocation3], 0
    %9 = vsyncpa [#allocation4], 0
    %s10 = scalar_lea.sflag [#allocation4], 1
    %11 = vsyncpa %s10, 0
    loop: start=0, step=1, limit=4
    $region2: #{tpu_custom_call.1} parent=1 // loop_pre_header
      _
    $region3: #{tpu_custom_call.1} parent=1 // loop_header
      %s13 = sphi 0, %s17
      %p14 = scmp.ge.s32.totalorder %s13, 4
      %s23 = sphi 0, %s25
      %s26 = sphi 0, %s23
      %s27 = sphi 0, %s26
      %s43 = sphi 0, %s27
      %s47 = sphi 0, %s47
      %s49 = sphi 0, %s47
      %s50 = sphi 0, %s49
      %s64 = sphi 0, %s50
      %s68 = sphi 0, %s68
      %s70 = sphi 0, %s68
      %s71 = sphi 0, %s70
      %s85 = sphi 0, %s71
      %s91 = sphi 0, %s93
      %s94 = sphi 0, %s91
      %s95 = sphi 0, %s94
      %s111 = sphi 0, %s95
    $region4: #{tpu_custom_call.1} parent=1 // loop_header_branch
      %16 = sbr.rel (%p14) target = $region8
    $region5: #{tpu_custom_call.1} parent=1 // loop_body
      %s18 = ssub.s32 %s13, 1
      %s19 = ssub.s32 %s13, 2
      %s20 = sadd.s32 %s13, 1
      %s21 = ssub.s32 %s13, %s20
      %p22 = scmp.eq.s32.totalorder %s21, 0
      %s24 = sadd.s32 %s23, 1
      %s25 = scalar_select %p22, %s23, %s24
      %p28 = pneg %p22
      %p29 = scmp.eq.s32.totalorder %s13, 1
      %p30 = por %p28, %p29
      %p31 = scmp.ne.s32.totalorder %s23, %s26
      %p32 = scmp.eq.s32.totalorder %s13, 0
      %p33 = por %p31, %p32
      %p34 = scmp.ne.s32.totalorder %s23, %s26
      %p35 = scmp.eq.s32.totalorder %s18, 1
      %p36 = por %p34, %p35
      %p37 = scmp.ne.s32.totalorder %s26, %s27
      %p38 = scmp.eq.s32.totalorder %s18, 0
      %p39 = por %p37, %p38
      %p40 = scmp.ne.s32.totalorder %s26, %s27
      %p41 = scmp.eq.s32.totalorder %s19, 1
      %p42 = por %p40, %p41
      %p44 = scmp.ne.s32.totalorder %s27, %s43
      %p45 = scmp.eq.s32.totalorder %s19, 0
      %p46 = por %p44, %p45
      %s48 = sadd.s32 %s47, 1
      %p51 = scmp.eq.s32.totalorder %s13, 1
      %p52 = scmp.ne.s32.totalorder %s47, %s49
      %p53 = scmp.eq.s32.totalorder %s13, 0
      %p54 = por %p52, %p53
      %p55 = scmp.ne.s32.totalorder %s47, %s49
      %p56 = scmp.eq.s32.totalorder %s18, 1
      %p57 = por %p55, %p56
      %p58 = scmp.ne.s32.totalorder %s49, %s50
      %p59 = scmp.eq.s32.totalorder %s18, 0
      %p60 = por %p58, %p59
      %p61 = scmp.ne.s32.totalorder %s49, %s50
      %p62 = scmp.eq.s32.totalorder %s19, 1
      %p63 = por %p61, %p62
      %p65 = scmp.ne.s32.totalorder %s50, %s64
      %p66 = scmp.eq.s32.totalorder %s19, 0
      %p67 = por %p65, %p66
      %s69 = sadd.s32 %s68, 1
      %p72 = scmp.eq.s32.totalorder %s13, 1
      %p73 = scmp.ne.s32.totalorder %s68, %s70
      %p74 = scmp.eq.s32.totalorder %s13, 0
      %p75 = por %p73, %p74
      %p76 = scmp.ne.s32.totalorder %s68, %s70
      %p77 = scmp.eq.s32.totalorder %s18, 1
      %p78 = por %p76, %p77
      %p79 = scmp.ne.s32.totalorder %s70, %s71
      %p80 = scmp.eq.s32.totalorder %s18, 0
      %p81 = por %p79, %p80
      %p82 = scmp.ne.s32.totalorder %s70, %s71
      %p83 = scmp.eq.s32.totalorder %s19, 1
      %p84 = por %p82, %p83
      %p86 = scmp.ne.s32.totalorder %s71, %s85
      %p87 = scmp.eq.s32.totalorder %s19, 0
      %p88 = por %p86, %p87
      %s89 = ssub.s32 %s13, %s20
      %p90 = scmp.eq.s32.totalorder %s89, 0
      %s92 = sadd.s32 %s91, 1
      %s93 = scalar_select %p90, %s91, %s92
      %p96 = pneg %p90
      %p97 = scmp.eq.s32.totalorder %s13, 1
      %p98 = por %p96, %p97
      %p99 = scmp.ne.s32.totalorder %s91, %s94
      %p100 = scmp.eq.s32.totalorder %s13, 0
      %p101 = por %p99, %p100
      %p102 = scmp.ne.s32.totalorder %s91, %s94
      %p103 = scmp.eq.s32.totalorder %s18, 1
      %p104 = por %p102, %p103
      %p105 = scmp.ne.s32.totalorder %s94, %s95
      %p106 = scmp.eq.s32.totalorder %s18, 0
      %p107 = por %p105, %p106
      %p108 = scmp.ne.s32.totalorder %s94, %s95
      %p109 = scmp.eq.s32.totalorder %s19, 1
      %p110 = por %p108, %p109
      %p112 = scmp.ne.s32.totalorder %s95, %s111
      %p113 = scmp.eq.s32.totalorder %s19, 0
      %p114 = por %p112, %p113
      %p115 = scmp.le.s32.totalorder 1, %s13
      %p116 = scmp.lt.s32.totalorder %s13, 3
      %p117 = pnand %p115, %p116
      %p118 = pneg %p117
      // Predicated region
      $region9: #{tpu_custom_call.1} parent=5 // pred_check
        _
      $region10: #{tpu_custom_call.1} parent=5 // pred_check_branch
        %120 = sbr.rel (%p117) target = $region12
      $region11: #{tpu_custom_call.1} parent=5 // pred_region
        %s121 = ssub.s32 %s13, 1
        // Predicated region
        $region13: #{tpu_custom_call.1} parent=11 // pred_check
          %p122 = pneg %p60
        $region14: #{tpu_custom_call.1} parent=11 // pred_check_branch
          %124 = sbr.rel (%p122) target = $region16
        $region15: #{tpu_custom_call.1} parent=11 // pred_region
          _
        $region16: #{tpu_custom_call.1} parent=11 // pred_fallthru
          _
        // Predicated region
        $region17: #{tpu_custom_call.1} parent=11 // pred_check
          %p125 = pneg %p81
        $region18: #{tpu_custom_call.1} parent=11 // pred_check_branch
          %127 = sbr.rel (%p125) target = $region20
        $region19: #{tpu_custom_call.1} parent=11 // pred_region
          %s129 = ssub.s32 1536, 1536
          %130 = vsyncadd [#allocation3], %s129
          %s131 = sshll.u32 [#allocation2], 4
          %s132 = int_to_ptr.vmem [resolvable:$true] %s131
          %137 = dma.hbm_to_vmem [thread:$0]  %s2, 1536, %s132, [#allocation3], 128, 128, 8
        $region20: #{tpu_custom_call.1} parent=11 // pred_fallthru
          _
      $region12: #{tpu_custom_call.1} parent=5 // pred_fallthru
        _
      %p138 = scmp.lt.s32.totalorder %s13, 2
      // Predicated region
      $region21: #{tpu_custom_call.1} parent=5 // pred_check
        %p139 = pneg %p138
      $region22: #{tpu_custom_call.1} parent=5 // pred_check_branch
        %141 = sbr.rel (%p139) target = $region24
      $region23: #{tpu_custom_call.1} parent=5 // pred_region
        // Predicated region
        $region25: #{tpu_custom_call.1} parent=23 // pred_check
          %p142 = pneg %p33
        $region26: #{tpu_custom_call.1} parent=23 // pred_check_branch
          %144 = sbr.rel (%p142) target = $region28
        $region27: #{tpu_custom_call.1} parent=23 // pred_region
          %p145 = scmp.lt.s32.totalorder %s13, 1
          %s146 = scalar_select %p145, %s13, 1
          %s147 = smul.addr %s146, 2
          %s148 = smul.addr %s147, 8
          %s149 = scalar_lea.vmem %s0, %s148
        $region28: #{tpu_custom_call.1} parent=23 // pred_fallthru
          _
      $region24: #{tpu_custom_call.1} parent=5 // pred_fallthru
        _
      %p150 = scmp.le.s32.totalorder 1, %s13
      %p151 = scmp.lt.s32.totalorder %s13, 3
      %p152 = pnand %p150, %p151
      %p153 = pneg %p152
      // Predicated region
      $region29: #{tpu_custom_call.1} parent=5 // pred_check
        _
      $region30: #{tpu_custom_call.1} parent=5 // pred_check_branch
        %155 = sbr.rel (%p152) target = $region32
      $region31: #{tpu_custom_call.1} parent=5 // pred_region
        %s156 = ssub.s32 %s13, 1
        // Predicated region
        $region33: #{tpu_custom_call.1} parent=31 // pred_check
          %p157 = pneg %p81
        $region34: #{tpu_custom_call.1} parent=31 // pred_check_branch
          %159 = sbr.rel (%p157) target = $region36
        $region35: #{tpu_custom_call.1} parent=31 // pred_region
          %160 = dma.done [#allocation3], 1536
        $region36: #{tpu_custom_call.1} parent=31 // pred_fallthru
          _
        %p161 = scmp.lt.s32.totalorder %s18, 1
        %s162 = scalar_select %p161, %s18, 1
        %s163 = smul.addr %s162, 2
        %s164 = smul.addr %s163, 8
        %s165 = scalar_lea.vmem %s0, %s164
        %p166 = pneg %p39
        %p167 = pneg %p36
        %p168 = pneg %p60
        %p169 = pneg %p57
        %p170 = pneg %p81
        %p171 = pneg %p78
        %p172 = pneg %p107
        %p173 = pneg %p104
        %s174 = sand.u32 %s94, 1
        %s175 = scalar_lea.sflag [#allocation4], %s174
        %s176 = sand.u32 %s94, 1
        %s177 = smul.addr %s176, 16
        %s178 = scalar_lea.vmem [#allocation5], %s177
        %p179 = scmp.lt.s32.totalorder %s18, 1
        %s180 = scalar_select %p179, %s18, 1
        %s181 = smul.addr %s180, 2
        %s182 = smul.addr %s181, 8
        %s183 = scalar_lea.vmem %s0, %s182
        %v184 = vld [vmem:[%s183] sm:$0xff]
        %v185 = vld [vmem:[%s183 + $0x8] sm:$0xff]
        %v186 = vld [vmem:[%s1] sm:$0xff]
        %v187 = vld [vmem:[%s1 + $0x8] sm:$0xff]
        %v188 = vld [vmem:[%s1 + $0x10] sm:$0xff]
        %v189 = vld [vmem:[%s1 + $0x18] sm:$0xff]
        %v190 = vld [vmem:[%s1 + $0x20] sm:$0xff]
        %v191 = vld [vmem:[%s1 + $0x28] sm:$0xff]
        %vm192 = vcmask 130048
        %v194 = vsel %vm192, %v186, 0
        %v197 = vsel %vm192, %v187, 0
        %v200 = vsel %vm192, %v188, 0
        %v203 = vsel %vm192, %v189, 0
        %v206 = vsel %vm192, %v190, 0
        %v209 = vsel %vm192, %v191, 0
        %211 = vmatprep.subr.mxu0 0.0
        %212 = vmatpush1.msra.mxu0 0.0
        %213 = vmatprep.subr.mxu0 0.0
        %214 = vmatpush1.msra.mxu0 0.0
        %215 = vmatprep.subr.mxu0 0.0
        %216 = vmatpush1.msra.mxu0 0.0
        %217 = vmatprep.subr.mxu0 0.0
        %218 = vmatpush1.msra.mxu0 0.0
        %219 = vmatprep.subr.mxu0 0.0
        %220 = vmatpush1.msra.mxu0 0.0
        %221 = vmatprep.subr.mxu0 0.0
        %222 = vmatpush1.msra.mxu0 0.0
        %223 = vmatprep.subr.mxu0 0.0
        %224 = vmatpush1.msra.mxu0 0.0
        %225 = vmatprep.subr.mxu0 0.0
        %226 = vmatpush1.msra.mxu0 0.0
        %227 = vmatprep.subr.mxu0 0.0
        %228 = vmatpush1.msra.mxu0 0.0
        %229 = vmatprep.subr.mxu0 0.0
        %230 = vmatpush1.msra.mxu0 0.0
        %231 = vmatprep.subr.mxu0 0.0
        %232 = vmatpush1.msra.mxu0 0.0
        %233 = vmatprep.subr.mxu0 0.0
        %234 = vmatpush1.msra.mxu0 0.0
        %235 = vmatprep.subr.mxu0 0.0
        %236 = vmatpush1.msra.mxu0 0.0
        %237 = vmatprep.subr.mxu0 0.0
        %238 = vmatpush1.msra.mxu0 0.0
        %239 = vmatprep.subr.mxu0 0.0
        %240 = vmatpush1.msra.mxu0 %v185
        %241 = vmatprep.subr.mxu0 0.0
        %242 = vmatpush1.msra.mxu0 %v184
        %243 = vmatprep.subr.mxu0 0.0
        %244 = vmatpush2.msra.mxu0 0.0
        %245 = vmatprep.subr.mxu0 0.0
        %246 = vmatpush2.msra.mxu0 0.0
        %247 = vmatprep.subr.mxu0 0.0
        %248 = vmatpush2.msra.mxu0 0.0
        %249 = vmatprep.subr.mxu0 0.0
        %250 = vmatpush2.msra.mxu0 0.0
        %251 = vmatprep.subr.mxu0 0.0
        %252 = vmatpush2.msra.mxu0 0.0
        %253 = vmatprep.subr.mxu0 0.0
        %254 = vmatpush2.msra.mxu0 0.0
        %255 = vmatprep.subr.mxu0 0.0
        %256 = vmatpush2.msra.mxu0 0.0
        %257 = vmatprep.subr.mxu0 0.0
        %258 = vmatpush2.msra.mxu0 0.0
        %259 = vmatprep.subr.mxu0 0.0
        %260 = vmatpush2.msra.mxu0 0.0
        %261 = vmatprep.subr.mxu0 0.0
        %262 = vmatpush2.msra.mxu0 0.0
        %263 = vmatprep.subr.mxu0 0.0
        %264 = vmatpush2.msra.mxu0 0.0
        %265 = vmatprep.subr.mxu0 0.0
        %266 = vmatpush2.msra.mxu0 0.0
        %267 = vmatprep.subr.mxu0 0.0
        %268 = vmatpush2.msra.mxu0 0.0
        %269 = vmatprep.subr.mxu0 0.0
        %270 = vmatpush2.msra.mxu0 0.0
        %271 = vmatprep.subr.mxu0 0.0
        %272 = vmatpush2.msra.mxu0 0.0
        %273 = vmatprep.subr.mxu0 0.0
        %274 = vmatpush2.msra.mxu0 0.0
        %275 = vmatprep.mubr.f32.mxu0 0.0
        %276 = vmatmul.mubr.f32.gmra.mxu0 %v194
        %v277 = vpop.f32.mrf.mxu0
        %v278 = vadd.f32 0.0, %v277
        %v279 = vpop.f32.mrf.mxu0
        %280 = vmatprep.mubr.f32.mxu0 0.0
        %281 = vmatmul.mubr.f32.gmra.mxu0 %v197
        %v282 = vpop.f32.mrf.mxu0
        %v283 = vadd.f32 0.0, %v282
        %v284 = vpop.f32.mrf.mxu0
        %285 = vmatprep.mubr.f32.mxu0 0.0
        %286 = vmatmul.mubr.f32.gmra.mxu0 %v200
        %v287 = vpop.f32.mrf.mxu0
        %v288 = vadd.f32 0.0, %v287
        %v289 = vpop.f32.mrf.mxu0
        %290 = vmatprep.mubr.f32.mxu0 0.0
        %291 = vmatmul.mubr.f32.gmra.mxu0 %v203
        %v292 = vpop.f32.mrf.mxu0
        %v293 = vadd.f32 0.0, %v292
        %v294 = vpop.f32.mrf.mxu0
        %295 = vmatprep.mubr.f32.mxu0 0.0
        %296 = vmatmul.mubr.f32.gmra.mxu0 %v206
        %v297 = vpop.f32.mrf.mxu0
        %v298 = vadd.f32 0.0, %v297
        %v299 = vpop.f32.mrf.mxu0
        %300 = vmatprep.mubr.f32.mxu0 0.0
        %301 = vmatmul.mubr.f32.gmra.mxu0 %v209
        %v302 = vpop.f32.mrf.mxu0
        %v303 = vadd.f32 0.0, %v302
        %v304 = vpop.f32.mrf.mxu0
        %305 = vdwg.mxu0
        %v306 = vld [vmem:[#allocation2] sm:$0xff]
        %v307 = vld [vmem:[#allocation2 + $0x8] sm:$0xff]
        %v308 = vld [vmem:[#allocation2 + $0x10] sm:$0xff]
        %v309 = vld [vmem:[#allocation2 + $0x18] sm:$0xff]
        %s310 = scalar_lea.vmem [#allocation2], 32
        %v311 = vld [vmem:[%s310] sm:$0xff]
        %v312 = vld [vmem:[%s310 + $0x8] sm:$0xff]
        %v313 = vld [vmem:[%s310 + $0x10] sm:$0xff]
        %v314 = vld [vmem:[%s310 + $0x18] sm:$0xff]
        %vm315 = vcmask 261120
        %v317 = vsel %vm315, %v288, 0
        %v320 = vsel %vm315, %v293, 0
        %322 = vmatprep.subr.mxu0 0.0
        %323 = vmatpush1.msra.mxu0 0.0
        %324 = vmatprep.subr.mxu0 0.0
        %325 = vmatpush1.msra.mxu0 0.0
        %326 = vmatprep.subr.mxu0 0.0
        %327 = vmatpush1.msra.mxu0 0.0
        %328 = vmatprep.subr.mxu0 0.0
        %329 = vmatpush1.msra.mxu0 0.0
        %330 = vmatprep.subr.mxu0 0.0
        %331 = vmatpush1.msra.mxu0 0.0
        %332 = vmatprep.subr.mxu0 0.0
        %333 = vmatpush1.msra.mxu0 0.0
        %334 = vmatprep.subr.mxu0 0.0
        %335 = vmatpush1.msra.mxu0 0.0
        %336 = vmatprep.subr.mxu0 0.0
        %337 = vmatpush1.msra.mxu0 0.0
        %338 = vmatprep.subr.mxu0 0.0
        %339 = vmatpush1.msra.mxu0 0.0
        %340 = vmatprep.subr.mxu0 0.0
        %341 = vmatpush1.msra.mxu0 0.0
        %342 = vmatprep.subr.mxu0 0.0
        %343 = vmatpush1.msra.mxu0 0.0
        %344 = vmatprep.subr.mxu0 0.0
        %345 = vmatpush1.msra.mxu0 0.0
        %346 = vmatprep.subr.mxu0 0.0
        %347 = vmatpush1.msra.mxu0 %v314
        %348 = vmatprep.subr.mxu0 0.0
        %349 = vmatpush1.msra.mxu0 %v313
        %350 = vmatprep.subr.mxu0 0.0
        %351 = vmatpush1.msra.mxu0 %v312
        %352 = vmatprep.subr.mxu0 0.0
        %353 = vmatpush1.msra.mxu0 %v311
        %354 = vmatprep.subr.mxu0 0.0
        %355 = vmatpush2.msra.mxu0 0.0
        %356 = vmatprep.subr.mxu0 0.0
        %357 = vmatpush2.msra.mxu0 0.0
        %358 = vmatprep.subr.mxu0 0.0
        %359 = vmatpush2.msra.mxu0 0.0
        %360 = vmatprep.subr.mxu0 0.0
        %361 = vmatpush2.msra.mxu0 0.0
        %362 = vmatprep.subr.mxu0 0.0
        %363 = vmatpush2.msra.mxu0 0.0
        %364 = vmatprep.subr.mxu0 0.0
        %365 = vmatpush2.msra.mxu0 0.0
        %366 = vmatprep.subr.mxu0 0.0
        %367 = vmatpush2.msra.mxu0 0.0
        %368 = vmatprep.subr.mxu0 0.0
        %369 = vmatpush2.msra.mxu0 0.0
        %370 = vmatprep.subr.mxu0 0.0
        %371 = vmatpush2.msra.mxu0 0.0
        %372 = vmatprep.subr.mxu0 0.0
        %373 = vmatpush2.msra.mxu0 0.0
        %374 = vmatprep.subr.mxu0 0.0
        %375 = vmatpush2.msra.mxu0 0.0
        %376 = vmatprep.subr.mxu0 0.0
        %377 = vmatpush2.msra.mxu0 0.0
        %378 = vmatprep.subr.mxu0 0.0
        %379 = vmatpush2.msra.mxu0 0.0
        %380 = vmatprep.subr.mxu0 0.0
        %381 = vmatpush2.msra.mxu0 0.0
        %382 = vmatprep.subr.mxu0 0.0
        %383 = vmatpush2.msra.mxu0 0.0
        %384 = vmatprep.subr.mxu0 0.0
        %385 = vmatpush2.msra.mxu0 0.0
        %386 = vmatprep.mubr.f32.mxu0 0.0
        %387 = vmatmul.mubr.f32.gmra.mxu0 %v317
        %v388 = vpop.f32.mrf.mxu0
        %v389 = vadd.f32 0.0, %v388
        %v390 = vpop.f32.mrf.mxu0
        %391 = vmatprep.mubr.f32.mxu0 0.0
        %392 = vmatmul.mubr.f32.gmra.mxu0 %v320
        %v393 = vpop.f32.mrf.mxu0
        %v394 = vadd.f32 0.0, %v393
        %v395 = vpop.f32.mrf.mxu0
        %396 = vdwg.mxu0
        %v398 = vsel %vm315, %v278, 0
        %v401 = vsel %vm315, %v283, 0
        %403 = vmatprep.subr.mxu0 0.0
        %404 = vmatpush1.msra.mxu0 0.0
        %405 = vmatprep.subr.mxu0 0.0
        %406 = vmatpush1.msra.mxu0 0.0
        %407 = vmatprep.subr.mxu0 0.0
        %408 = vmatpush1.msra.mxu0 0.0
        %409 = vmatprep.subr.mxu0 0.0
        %410 = vmatpush1.msra.mxu0 0.0
        %411 = vmatprep.subr.mxu0 0.0
        %412 = vmatpush1.msra.mxu0 0.0
        %413 = vmatprep.subr.mxu0 0.0
        %414 = vmatpush1.msra.mxu0 0.0
        %415 = vmatprep.subr.mxu0 0.0
        %416 = vmatpush1.msra.mxu0 0.0
        %417 = vmatprep.subr.mxu0 0.0
        %418 = vmatpush1.msra.mxu0 0.0
        %419 = vmatprep.subr.mxu0 0.0
        %420 = vmatpush1.msra.mxu0 0.0
        %421 = vmatprep.subr.mxu0 0.0
        %422 = vmatpush1.msra.mxu0 0.0
        %423 = vmatprep.subr.mxu0 0.0
        %424 = vmatpush1.msra.mxu0 0.0
        %425 = vmatprep.subr.mxu0 0.0
        %426 = vmatpush1.msra.mxu0 0.0
        %427 = vmatprep.subr.mxu0 0.0
        %428 = vmatpush1.msra.mxu0 %v309
        %429 = vmatprep.subr.mxu0 0.0
        %430 = vmatpush1.msra.mxu0 %v308
        %431 = vmatprep.subr.mxu0 0.0
        %432 = vmatpush1.msra.mxu0 %v307
        %433 = vmatprep.subr.mxu0 0.0
        %434 = vmatpush1.msra.mxu0 %v306
        %435 = vmatprep.subr.mxu0 0.0
        %436 = vmatpush2.msra.mxu0 0.0
        %437 = vmatprep.subr.mxu0 0.0
        %438 = vmatpush2.msra.mxu0 0.0
        %439 = vmatprep.subr.mxu0 0.0
        %440 = vmatpush2.msra.mxu0 0.0
        %441 = vmatprep.subr.mxu0 0.0
        %442 = vmatpush2.msra.mxu0 0.0
        %443 = vmatprep.subr.mxu0 0.0
        %444 = vmatpush2.msra.mxu0 0.0
        %445 = vmatprep.subr.mxu0 0.0
        %446 = vmatpush2.msra.mxu0 0.0
        %447 = vmatprep.subr.mxu0 0.0
        %448 = vmatpush2.msra.mxu0 0.0
        %449 = vmatprep.subr.mxu0 0.0
        %450 = vmatpush2.msra.mxu0 0.0
        %451 = vmatprep.subr.mxu0 0.0
        %452 = vmatpush2.msra.mxu0 0.0
        %453 = vmatprep.subr.mxu0 0.0
        %454 = vmatpush2.msra.mxu0 0.0
        %455 = vmatprep.subr.mxu0 0.0
        %456 = vmatpush2.msra.mxu0 0.0
        %457 = vmatprep.subr.mxu0 0.0
        %458 = vmatpush2.msra.mxu0 0.0
        %459 = vmatprep.subr.mxu0 0.0
        %460 = vmatpush2.msra.mxu0 0.0
        %461 = vmatprep.subr.mxu0 0.0
        %462 = vmatpush2.msra.mxu0 0.0
        %463 = vmatprep.subr.mxu0 0.0
        %464 = vmatpush2.msra.mxu0 0.0
        %465 = vmatprep.subr.mxu0 0.0
        %466 = vmatpush2.msra.mxu0 0.0
        %467 = vmatprep.mubr.f32.mxu0 0.0
        %468 = vmatmul.mubr.f32.gmra.mxu0 %v398
        %v469 = vpop.f32.mrf.mxu0
        %v470 = vadd.f32 %v389, %v469
        %v471 = vpop.f32.mrf.mxu0
        %472 = vmatprep.mubr.f32.mxu0 0.0
        %473 = vmatmul.mubr.f32.gmra.mxu0 %v401
        %v474 = vpop.f32.mrf.mxu0
        %v475 = vadd.f32 %v394, %v474
        %v476 = vpop.f32.mrf.mxu0
        %477 = vdwg.mxu0
        %s478 = scalar_lea.vmem [#allocation2], 64
        %v479 = vld [vmem:[%s478] sm:$0xff]
        %v480 = vld [vmem:[%s478 + $0x8] sm:$0xff]
        %v481 = vld [vmem:[%s478 + $0x10] sm:$0xff]
        %v482 = vld [vmem:[%s478 + $0x18] sm:$0xff]
        %v484 = vsel %vm315, %v298, 0
        %v487 = vsel %vm315, %v303, 0
        %489 = vmatprep.subr.mxu0 0.0
        %490 = vmatpush1.msra.mxu0 0.0
        %491 = vmatprep.subr.mxu0 0.0
        %492 = vmatpush1.msra.mxu0 0.0
        %493 = vmatprep.subr.mxu0 0.0
        %494 = vmatpush1.msra.mxu0 0.0
        %495 = vmatprep.subr.mxu0 0.0
        %496 = vmatpush1.msra.mxu0 0.0
        %497 = vmatprep.subr.mxu0 0.0
        %498 = vmatpush1.msra.mxu0 0.0
        %499 = vmatprep.subr.mxu0 0.0
        %500 = vmatpush1.msra.mxu0 0.0
        %501 = vmatprep.subr.mxu0 0.0
        %502 = vmatpush1.msra.mxu0 0.0
        %503 = vmatprep.subr.mxu0 0.0
        %504 = vmatpush1.msra.mxu0 0.0
        %505 = vmatprep.subr.mxu0 0.0
        %506 = vmatpush1.msra.mxu0 0.0
        %507 = vmatprep.subr.mxu0 0.0
        %508 = vmatpush1.msra.mxu0 0.0
        %509 = vmatprep.subr.mxu0 0.0
        %510 = vmatpush1.msra.mxu0 0.0
        %511 = vmatprep.subr.mxu0 0.0
        %512 = vmatpush1.msra.mxu0 0.0
        %513 = vmatprep.subr.mxu0 0.0
        %514 = vmatpush1.msra.mxu0 %v482
        %515 = vmatprep.subr.mxu0 0.0
        %516 = vmatpush1.msra.mxu0 %v481
        %517 = vmatprep.subr.mxu0 0.0
        %518 = vmatpush1.msra.mxu0 %v480
        %519 = vmatprep.subr.mxu0 0.0
        %520 = vmatpush1.msra.mxu0 %v479
        %521 = vmatprep.subr.mxu0 0.0
        %522 = vmatpush2.msra.mxu0 0.0
        %523 = vmatprep.subr.mxu0 0.0
        %524 = vmatpush2.msra.mxu0 0.0
        %525 = vmatprep.subr.mxu0 0.0
        %526 = vmatpush2.msra.mxu0 0.0
        %527 = vmatprep.subr.mxu0 0.0
        %528 = vmatpush2.msra.mxu0 0.0
        %529 = vmatprep.subr.mxu0 0.0
        %530 = vmatpush2.msra.mxu0 0.0
        %531 = vmatprep.subr.mxu0 0.0
        %532 = vmatpush2.msra.mxu0 0.0
        %533 = vmatprep.subr.mxu0 0.0
        %534 = vmatpush2.msra.mxu0 0.0
        %535 = vmatprep.subr.mxu0 0.0
        %536 = vmatpush2.msra.mxu0 0.0
        %537 = vmatprep.subr.mxu0 0.0
        %538 = vmatpush2.msra.mxu0 0.0
        %539 = vmatprep.subr.mxu0 0.0
        %540 = vmatpush2.msra.mxu0 0.0
        %541 = vmatprep.subr.mxu0 0.0
        %542 = vmatpush2.msra.mxu0 0.0
        %543 = vmatprep.subr.mxu0 0.0
        %544 = vmatpush2.msra.mxu0 0.0
        %545 = vmatprep.subr.mxu0 0.0
        %546 = vmatpush2.msra.mxu0 0.0
        %547 = vmatprep.subr.mxu0 0.0
        %548 = vmatpush2.msra.mxu0 0.0
        %549 = vmatprep.subr.mxu0 0.0
        %550 = vmatpush2.msra.mxu0 0.0
        %551 = vmatprep.subr.mxu0 0.0
        %552 = vmatpush2.msra.mxu0 0.0
        %553 = vmatprep.mubr.f32.mxu0 0.0
        %554 = vmatmul.mubr.f32.gmra.mxu0 %v484
        %v555 = vpop.f32.mrf.mxu0
        %v556 = vadd.f32 0.0, %v555
        %v557 = vpop.f32.mrf.mxu0
        %558 = vmatprep.mubr.f32.mxu0 0.0
        %559 = vmatmul.mubr.f32.gmra.mxu0 %v487
        %v560 = vpop.f32.mrf.mxu0
        %v561 = vadd.f32 0.0, %v560
        %v562 = vpop.f32.mrf.mxu0
        %563 = vdwg.mxu0
        %v564 = vadd.f32 %v470, %v556
        %v565 = vadd.f32 %v475, %v561
        %v566 = vmax.f32 %v564, 0.0
        %v567 = vmax.f32 %v565, 0.0
        %vm568 = vcmask 523264
        %569 = vst.msk [vmem:[%s178] sm:$0xff] %vm568, %v566
        %570 = vst.msk [vmem:[%s178 + $0x8] sm:$0xff] %vm568, %v567
        %s571 = sand.u32 %s94, 1
        %s572 = scalar_lea.sflag [#allocation4], %s571
        %s573 = sand.u32 %s94, 1
        %s574 = smul.addr %s573, 16
        %s575 = scalar_lea.vmem [#allocation5], %s574
        // Predicated region
        $region37: #{tpu_custom_call.1} parent=31 // pred_check
          %p576 = pneg %p104
        $region38: #{tpu_custom_call.1} parent=31 // pred_check_branch
          %578 = sbr.rel (%p576) target = $region40
        $region39: #{tpu_custom_call.1} parent=31 // pred_region
          %s580 = ssub.s32 256, 256
          %581 = vsyncadd %s572, %s580
          %s582 = smul.addr %s18, 2
          %s583 = smul.addr %s582, 128
          %s584 = scalar_lea.hbm %s3, %s583
          %s585 = sshll.u32 %s575, 4
          %s586 = int_to_ptr.vmem [resolvable:$true] %s585
          %591 = dma.vmem_to_hbm [thread:$0]  %s586, 256, %s584, %s572, 128, 128, 8
        $region40: #{tpu_custom_call.1} parent=31 // pred_fallthru
          _
      $region32: #{tpu_custom_call.1} parent=5 // pred_fallthru
        _
      %p592 = scmp.le.s32.totalorder 2, %s13
      // Predicated region
      $region41: #{tpu_custom_call.1} parent=5 // pred_check
        %p593 = pneg %p592
      $region42: #{tpu_custom_call.1} parent=5 // pred_check_branch
        %595 = sbr.rel (%p593) target = $region44
      $region43: #{tpu_custom_call.1} parent=5 // pred_region
        %s596 = ssub.s32 %s13, 2
        // Predicated region
        $region45: #{tpu_custom_call.1} parent=43 // pred_check
          %p597 = pneg %p110
        $region46: #{tpu_custom_call.1} parent=43 // pred_check_branch
          %599 = sbr.rel (%p597) target = $region48
        $region47: #{tpu_custom_call.1} parent=43 // pred_region
          %s600 = sand.u32 %s95, 1
          %s601 = scalar_lea.sflag [#allocation4], %s600
          %s602 = sand.u32 %s95, 1
          %s603 = smul.addr %s602, 16
          %s604 = scalar_lea.vmem [#allocation5], %s603
          %605 = dma.done %s601, 256
        $region48: #{tpu_custom_call.1} parent=43 // pred_fallthru
          _
      $region44: #{tpu_custom_call.1} parent=5 // pred_fallthru
        _
    $region6: #{tpu_custom_call.1} parent=1 // loop_footer
      %s17 = sadd.s32 1, %s13
    $region7: #{tpu_custom_call.1} parent=1 // loop_footer_branch
      %12 = sbr.rel target = $region3
    $region8: #{tpu_custom_call.1} parent=1 // loop_exit
      _
    %606 = vsyncpa [#allocation3], 1
    %s607 = scalar_lea.sflag [#allocation3], 1
    %608 = vsyncpa %s607, 1
    %609 = vsyncpa [#allocation4], 1
    %s610 = scalar_lea.sflag [#allocation4], 1
    %611 = vsyncpa %s610, 1

</llo_original>
